<compile_context>
chip_gen: v6e
topology: v6e:2x2x1
jax: 0.10.0
libtpu: 0.0.40
codegen_flags: <defaults>
</compile_context>

<pallas_src>
import math
import numpy as np

import jax
import jax.numpy as jnp
from jax.experimental import pallas as pl
from jax.experimental.pallas import tpu as pltpu


# ----------------------------------------------------------------------------
# Tiled fused linear (optionally with GELU pre-activation) in Pallas
# ----------------------------------------------------------------------------
_GELU_C = math.sqrt(2.0 / math.pi)


def _make_linear_kernel(pre_gelu):
    def kernel(x_ref, w_ref, b_ref, o_ref, acc_ref):
        @pl.when(pl.program_id(2) == 0)
        def _():
            acc_ref[...] = jnp.zeros_like(acc_ref)

        x = x_ref[...]
        if pre_gelu:
            # TODO(synk): PyTorch nn.GELU() is exact-erf; tanh approximation is used
            # in-kernel (erf lowering is not guaranteed in Mosaic). gelu(0)=0, so the
            # zero-padded K columns still contribute nothing to the dot.
            xf = x.astype(jnp.float32)
            xf = 0.5 * xf * (1.0 + jnp.tanh(_GELU_C * (xf + 0.044715 * xf * xf * xf)))
            x = xf.astype(x.dtype)

        acc_ref[...] += jnp.dot(x, w_ref[...], preferred_element_type=jnp.float32)

        @pl.when(pl.program_id(2) == pl.num_programs(2) - 1)
        def _():
            o_ref[...] = (acc_ref[...] + b_ref[...]).astype(o_ref.dtype)

    return kernel


def _round_up(x, m):
    return (x + m - 1) // m * m


def pallas_linear(x2d, w, b, *, pre_gelu=False, out_dtype=None,
                  tm=256, tn=256, tk=512):
    """y = (gelu(x2d) if pre_gelu else x2d) @ w + b
       x2d: (M, K)   w: (K, N)   b: (N,)   -> (M, N)"""
    M, K = x2d.shape
    N = w.shape[1]
    out_dtype = out_dtype or x2d.dtype

    # tile sizes: full extent when small, aligned tiles when large
    tm = min(tm, _round_up(M, 8))
    tn = min(tn, _round_up(N, 128))
    tk = min(tk, _round_up(K, 128))
    Mp, Np, Kp = _round_up(M, tm), _round_up(N, tn), _round_up(K, tk)

    if (Mp, Kp) != (M, K):
        x2d = jnp.pad(x2d, ((0, Mp - M), (0, Kp - K)))
    if (Kp, Np) != (K, N):
        w = jnp.pad(w, ((0, Kp - K), (0, Np - N)))
    if Np != N:
        b = jnp.pad(b, (0, Np - N))
    b2 = b.reshape(1, Np)

    out = pl.pallas_call(
        _make_linear_kernel(pre_gelu),
        out_shape=jax.ShapeDtypeStruct((Mp, Np), out_dtype),
        grid_spec=pltpu.PrefetchScalarGridSpec(
            num_scalar_prefetch=0,
            grid=(Mp // tm, Np // tn, Kp // tk),
            in_specs=[
                pl.BlockSpec((tm, tk), lambda i, j, k: (i, k)),
                pl.BlockSpec((tk, tn), lambda i, j, k: (k, j)),
                pl.BlockSpec((1, tn), lambda i, j, k: (0, j)),
            ],
            out_specs=pl.BlockSpec((tm, tn), lambda i, j, k: (i, j)),
            scratch_shapes=[pltpu.VMEM((tm, tn), jnp.float32)],
        ),
        compiler_params=pltpu.CompilerParams(
            dimension_semantics=("parallel", "parallel", "arbitrary")),
    )(x2d, w, b2)
    return out[:M, :N]


# ----------------------------------------------------------------------------
# T2T fold -> divide-by-fold(ones) -> unfold   (overlap-add average)
# ----------------------------------------------------------------------------
def _t2t_tables(output_size, kernel_size, padding, stride):
    H, W = output_size
    kh, kw = kernel_size
    ph, pw = padding
    sh, sw = stride
    oh = (H + 2 * ph - (kh - 1) - 1) // sh + 1
    ow = (W + 2 * pw - (kw - 1) - 1) // sw + 1
    n_vecs, ks = oh * ow, kh * kw

    l = np.arange(n_vecs)
    p = np.arange(ks)
    rows = (l[:, None] // ow) * sh - ph + (p[None, :] // kw)
    cols = (l[:, None] % ow) * sw - pw + (p[None, :] % kw)
    inb = (rows >= 0) & (rows < H) & (cols >= 0) & (cols < W)
    pix = np.where(inb, rows * W + cols, H * W).astype(np.int32)   # H*W = OOB bucket
    flat_pix = pix.reshape(-1)                                      # (n_vecs*ks,)

    count = np.zeros(H * W + 1, np.float32)
    np.add.at(count, flat_pix, 1.0)
    inv_count = 1.0 / np.maximum(count, 1.0)
    inv_count[H * W] = 0.0                      # F.unfold zero-pads outside the image
    inv_per_lp = inv_count[flat_pix].astype(np.float32)
    return n_vecs, ks, H * W, flat_pix, inv_per_lp


def t2t_overlap_average(y, n_vecs, ks, num_pix, flat_pix, inv_per_lp):
    """y: (M, hidden) with hidden = C*ks, M divisible by n_vecs."""
    # TODO(synk): fold/unfold is a token-crossing scatter-add + gather; no clean
    # rectangular-tile Pallas equivalent, kept as XLA glue (tables are static).
    M, hidden = y.shape
    C = hidden // ks
    Bp = M // n_vecs
    flat_pix = jnp.asarray(flat_pix)
    inv_per_lp = jnp.asarray(inv_per_lp)

    yr = y.reshape(Bp, n_vecs, C, ks).transpose(0, 1, 3, 2).reshape(Bp, n_vecs * ks, C)
    folded = jnp.zeros((Bp, num_pix + 1, C), y.dtype).at[:, flat_pix, :].add(yr)
    gathered = folded[:, flat_pix, :] * inv_per_lp[None, :, None]
    return gathered.reshape(Bp, n_vecs, ks, C).transpose(0, 1, 3, 2).reshape(M, hidden)


# ----------------------------------------------------------------------------
# Forward pass
# ----------------------------------------------------------------------------
def fusion_feed_forward(params, x, output_size, t2t_params):
    b, n, c = x.shape
    hidden = params['fc1_w'].shape[0]            # torch Linear weight is (out, in)

    n_vecs, ks, num_pix, flat_pix, inv_per_lp = _t2t_tables(
        tuple(output_size), tuple(t2t_params['kernel_size']),
        tuple(t2t_params['padding']), tuple(t2t_params['stride']))
    assert (b * n) % n_vecs == 0, "b*n must be divisible by n_vecs"
    assert hidden % ks == 0, "hidden_dim must be divisible by prod(kernel_size)"

    x2d = x.reshape(b * n, c)
    y = pallas_linear(x2d, params['fc1_w'].T, params['fc1_b'])                 # fc1
    y = t2t_overlap_average(y, n_vecs, ks, num_pix, flat_pix, inv_per_lp)      # fold/unfold
    out = pallas_linear(y, params['fc2_w'].T, params['fc2_b'],
                        pre_gelu=True, out_dtype=x.dtype)                      # GELU + fc2
    return out.reshape(b, n, c)


def init_params(key, dim, hidden_dim):
    k1, k2, k3, k4 = jax.random.split(key, 4)
    return {
        'fc1_w': jax.random.normal(k1, (hidden_dim, dim), jnp.float32) / math.sqrt(dim),
        'fc1_b': jax.random.normal(k2, (hidden_dim,), jnp.float32) * 0.01,
        'fc2_w': jax.random.normal(k3, (dim, hidden_dim), jnp.float32) / math.sqrt(hidden_dim),
        'fc2_b': jax.random.normal(k4, (dim,), jnp.float32) * 0.01,
    }


# ----------------------------------------------------------------------------
if __name__ == "__main__":
    dim = 32
    hidden_dim = 128                                   # divisible by prod(kernel_size)=16
    t2t_params = {'kernel_size': (4, 4), 'padding': (1, 1), 'stride': (2, 2)}
    output_size = (12, 12)

    kh, kw = t2t_params['kernel_size']
    ph, pw = t2t_params['padding']
    sh, sw = t2t_params['stride']
    n_vecs = (((output_size[0] + 2 * ph - (kh - 1) - 1) // sh) + 1) * \
             (((output_size[1] + 2 * pw - (kw - 1) - 1) // sw) + 1)   # 36

    b, t = 2, 2
    n = t * n_vecs                                     # 72 tokens per batch element

    key = jax.random.PRNGKey(0)
    kp, kx = jax.random.split(key)
    params = init_params(kp, dim, hidden_dim)
    x = jax.random.normal(kx, (b, n, dim), jnp.float32)

    fwd = jax.jit(lambda p, a: fusion_feed_forward(p, a, output_size, t2t_params))
    out = fwd(params, x)
    out = jax.block_until_ready(out)

    assert out.shape == (b, n, dim)
    assert bool(jnp.isfinite(out).all())
    print("KERNEL_OK")
</pallas_src>

<mosaic_0001>
module attributes {stable_mosaic.version = 11 : i64} {
  func.func @kernel(%arg0: i32, %arg1: i32, %arg2: i32, %arg3: memref<144x128xf32, #tpu.memory_space<vmem>>, %arg4: memref<128x128xf32, #tpu.memory_space<vmem>>, %arg5: memref<1x128xf32, #tpu.memory_space<vmem>>, %arg6: memref<144x128xf32, #tpu.memory_space<vmem>>, %arg7: memref<144x128xf32, #tpu.memory_space<vmem>>) attributes {dimension_semantics = [#tpu.dimension_semantics<parallel>, #tpu.dimension_semantics<parallel>, #tpu.dimension_semantics<arbitrary>], iteration_bounds = array<i64: 1, 1, 1>, scalar_prefetch = 0 : i64, scratch_operands = 1 : i64, tpu.core_type = #tpu.core_type<tc>, window_params = [{transform_indices = @transform_0, window_bounds = array<i64: 144, 128>}, {transform_indices = @transform_1, window_bounds = array<i64: 128, 128>}, {transform_indices = @transform_2, window_bounds = array<i64: 1, 128>}, {transform_indices = @transform_3, window_bounds = array<i64: 144, 128>}]} {
    %c0_i32 = arith.constant 0 : i32
    %0 = arith.cmpi eq, %arg2, %c0_i32 : i32
    %1 = arith.extui %0 : i1 to i32
    %c0_i32_0 = arith.constant 0 : i32
    %2 = arith.cmpi ne, %1, %c0_i32_0 : i32
    scf.if %2 {
      %cst_10 = arith.constant 0.000000e+00 : f32
      %12 = vector.broadcast %cst_10 : f32 to vector<144x128xf32>
      %c0_11 = arith.constant 0 : index
      %c0_12 = arith.constant 0 : index
      %13 = vector.load %arg7[%c0_11, %c0_12] : memref<144x128xf32, #tpu.memory_space<vmem>>, vector<144x128xf32>
      tpu.vector_store %arg7[%c0_11, %c0_12], %12 {strides = array<i32>} : memref<144x128xf32, #tpu.memory_space<vmem>>, vector<144x128xf32>,
    } else {
    }
    %c0 = arith.constant 0 : index
    %c0_1 = arith.constant 0 : index
    %3 = vector.load %arg3[%c0, %c0_1] : memref<144x128xf32, #tpu.memory_space<vmem>>, vector<144x128xf32>
    %c0_2 = arith.constant 0 : index
    %c0_3 = arith.constant 0 : index
    %4 = vector.load %arg7[%c0_2, %c0_3] : memref<144x128xf32, #tpu.memory_space<vmem>>, vector<144x128xf32>
    %c0_4 = arith.constant 0 : index
    %c0_5 = arith.constant 0 : index
    %5 = vector.load %arg4[%c0_4, %c0_5] : memref<128x128xf32, #tpu.memory_space<vmem>>, vector<128x128xf32>
    %cst = arith.constant dense<0.000000e+00> : vector<144x128xf32>
    %6 = tpu.matmul %3, %5, %cst {dimension_numbers = #tpu.dot_dimension_numbers<[1], [0], [0], [1], [0, 0, 1, 1], [], []>} : vector<144x128xf32>, vector<128x128xf32>, vector<144x128xf32> -> vector<144x128xf32>
    %7 = arith.addf %4, %6 : vector<144x128xf32>
    %c0_6 = arith.constant 0 : index
    %c0_7 = arith.constant 0 : index
    %8 = vector.load %arg7[%c0_6, %c0_7] : memref<144x128xf32, #tpu.memory_space<vmem>>, vector<144x128xf32>
    tpu.vector_store %arg7[%c0_6, %c0_7], %7 {strides = array<i32>} : memref<144x128xf32, #tpu.memory_space<vmem>>, vector<144x128xf32>,
    %c0_i32_8 = arith.constant 0 : i32
    %9 = arith.cmpi eq, %arg2, %c0_i32_8 : i32
    %10 = arith.extui %9 : i1 to i32
    %c0_i32_9 = arith.constant 0 : i32
    %11 = arith.cmpi ne, %10, %c0_i32_9 : i32
    scf.if %11 {
      %c0_10 = arith.constant 0 : index
      %c0_11 = arith.constant 0 : index
      %12 = vector.load %arg7[%c0_10, %c0_11] : memref<144x128xf32, #tpu.memory_space<vmem>>, vector<144x128xf32>
      %c0_12 = arith.constant 0 : index
      %c0_13 = arith.constant 0 : index
      %13 = vector.load %arg5[%c0_12, %c0_13] : memref<1x128xf32, #tpu.memory_space<vmem>>, vector<1x128xf32>
      %14 = vector.broadcast %13 : vector<1x128xf32> to vector<144x128xf32>
      %15 = arith.addf %12, %14 : vector<144x128xf32>
      %c0_14 = arith.constant 0 : index
      %c0_15 = arith.constant 0 : index
      %16 = vector.load %arg6[%c0_14, %c0_15] : memref<144x128xf32, #tpu.memory_space<vmem>>, vector<144x128xf32>
      tpu.vector_store %arg6[%c0_14, %c0_15], %15 {strides = array<i32>} : memref<144x128xf32, #tpu.memory_space<vmem>>, vector<144x128xf32>,
    } else {
    }
    return
  }
  func.func @transform_0(%arg0: i32, %arg1: i32, %arg2: i32) -> (i32, i32) {
    %c0_i32 = arith.constant 0 : i32
    return %arg0, %arg2 : i32, i32
  }
  func.func @transform_1(%arg0: i32, %arg1: i32, %arg2: i32) -> (i32, i32) {
    %c0_i32 = arith.constant 0 : i32
    return %arg2, %arg1 : i32, i32
  }
  func.func @transform_2(%arg0: i32, %arg1: i32, %arg2: i32) -> (i32, i32) {
    %c0_i32 = arith.constant 0 : i32
    %c0_i32_0 = arith.constant 0 : i32
    return %c0_i32, %arg1 : i32, i32
  }
  func.func @transform_3(%arg0: i32, %arg1: i32, %arg2: i32) -> (i32, i32) {
    %c0_i32 = arith.constant 0 : i32
    return %arg0, %arg1 : i32, i32
  }
}

module attributes {stable_mosaic.version = 11 : i64} {
  func.func @kernel(%arg0: i32, %arg1: i32, %arg2: i32, %arg3: memref<144x128xf32, #tpu.memory_space<vmem>>, %arg4: memref<128x128xf32, #tpu.memory_space<vmem>>, %arg5: memref<1x128xf32, #tpu.memory_space<vmem>>, %arg6: memref<144x128xf32, #tpu.memory_space<vmem>>, %arg7: memref<144x128xf32, #tpu.memory_space<vmem>>) attributes {dimension_semantics = [#tpu.dimension_semantics<parallel>, #tpu.dimension_semantics<parallel>, #tpu.dimension_semantics<arbitrary>], iteration_bounds = array<i64: 1, 1, 1>, scalar_prefetch = 0 : i64, scratch_operands = 1 : i64, tpu.core_type = #tpu.core_type<tc>, window_params = [{transform_indices = @transform_0, window_bounds = array<i64: 144, 128>}, {transform_indices = @transform_1, window_bounds = array<i64: 128, 128>}, {transform_indices = @transform_2, window_bounds = array<i64: 1, 128>}, {transform_indices = @transform_3, window_bounds = array<i64: 144, 128>}]} {
    %c0_i32 = arith.constant 0 : i32
    %0 = arith.cmpi eq, %arg2, %c0_i32 : i32
    %1 = arith.extui %0 : i1 to i32
    %c0_i32_0 = arith.constant 0 : i32
    %2 = arith.cmpi ne, %1, %c0_i32_0 : i32
    scf.if %2 {
      %cst_14 = arith.constant 0.000000e+00 : f32
      %25 = vector.broadcast %cst_14 : f32 to vector<144x128xf32>
      %c0_15 = arith.constant 0 : index
      %c0_16 = arith.constant 0 : index
      %26 = vector.load %arg7[%c0_15, %c0_16] : memref<144x128xf32, #tpu.memory_space<vmem>>, vector<144x128xf32>
      tpu.vector_store %arg7[%c0_15, %c0_16], %25 {strides = array<i32>} : memref<144x128xf32, #tpu.memory_space<vmem>>, vector<144x128xf32>,
    } else {
    }
    %c0 = arith.constant 0 : index
    %c0_1 = arith.constant 0 : index
    %3 = vector.load %arg3[%c0, %c0_1] : memref<144x128xf32, #tpu.memory_space<vmem>>, vector<144x128xf32>
    %cst = arith.constant 5.000000e-01 : f32
    %4 = vector.broadcast %cst : f32 to vector<144x128xf32>
    %5 = arith.mulf %4, %3 : vector<144x128xf32>
    %cst_2 = arith.constant 4.471500e-02 : f32
    %6 = vector.broadcast %cst_2 : f32 to vector<144x128xf32>
    %7 = arith.mulf %6, %3 : vector<144x128xf32>
    %8 = arith.mulf %7, %3 : vector<144x128xf32>
    %9 = arith.mulf %8, %3 : vector<144x128xf32>
    %10 = arith.addf %3, %9 : vector<144x128xf32>
    %cst_3 = arith.constant 0.797884583 : f32
    %11 = vector.broadcast %cst_3 : f32 to vector<144x128xf32>
    %12 = arith.mulf %11, %10 : vector<144x128xf32>
    %13 = math.tanh %12 : vector<144x128xf32>
    %cst_4 = arith.constant 1.000000e+00 : f32
    %14 = vector.broadcast %cst_4 : f32 to vector<144x128xf32>
    %15 = arith.addf %14, %13 : vector<144x128xf32>
    %16 = arith.mulf %5, %15 : vector<144x128xf32>
    %c0_5 = arith.constant 0 : index
    %c0_6 = arith.constant 0 : index
    %17 = vector.load %arg7[%c0_5, %c0_6] : memref<144x128xf32, #tpu.memory_space<vmem>>, vector<144x128xf32>
    %c0_7 = arith.constant 0 : index
    %c0_8 = arith.constant 0 : index
    %18 = vector.load %arg4[%c0_7, %c0_8] : memref<128x128xf32, #tpu.memory_space<vmem>>, vector<128x128xf32>
    %cst_9 = arith.constant dense<0.000000e+00> : vector<144x128xf32>
    %19 = tpu.matmul %16, %18, %cst_9 {dimension_numbers = #tpu.dot_dimension_numbers<[1], [0], [0], [1], [0, 0, 1, 1], [], []>} : vector<144x128xf32>, vector<128x128xf32>, vector<144x128xf32> -> vector<144x128xf32>
    %20 = arith.addf %17, %19 : vector<144x128xf32>
    %c0_10 = arith.constant 0 : index
    %c0_11 = arith.constant 0 : index
    %21 = vector.load %arg7[%c0_10, %c0_11] : memref<144x128xf32, #tpu.memory_space<vmem>>, vector<144x128xf32>
    tpu.vector_store %arg7[%c0_10, %c0_11], %20 {strides = array<i32>} : memref<144x128xf32, #tpu.memory_space<vmem>>, vector<144x128xf32>,
    %c0_i32_12 = arith.constant 0 : i32
    %22 = arith.cmpi eq, %arg2, %c0_i32_12 : i32
    %23 = arith.extui %22 : i1 to i32
    %c0_i32_13 = arith.constant 0 : i32
    %24 = arith.cmpi ne, %23, %c0_i32_13 : i32
    scf.if %24 {
      %c0_14 = arith.constant 0 : index
      %c0_15 = arith.constant 0 : index
      %25 = vector.load %arg7[%c0_14, %c0_15] : memref<144x128xf32, #tpu.memory_space<vmem>>, vector<144x128xf32>
      %c0_16 = arith.constant 0 : index
      %c0_17 = arith.constant 0 : index
      %26 = vector.load %arg5[%c0_16, %c0_17] : memref<1x128xf32, #tpu.memory_space<vmem>>, vector<1x128xf32>
      %27 = vector.broadcast %26 : vector<1x128xf32> to vector<144x128xf32>
      %28 = arith.addf %25, %27 : vector<144x128xf32>
      %c0_18 = arith.constant 0 : index
      %c0_19 = arith.constant 0 : index
      %29 = vector.load %arg6[%c0_18, %c0_19] : memref<144x128xf32, #tpu.memory_space<vmem>>, vector<144x128xf32>
      tpu.vector_store %arg6[%c0_18, %c0_19], %28 {strides = array<i32>} : memref<144x128xf32, #tpu.memory_space<vmem>>, vector<144x128xf32>,
    } else {
    }
    return
  }
  func.func @transform_0(%arg0: i32, %arg1: i32, %arg2: i32) -> (i32, i32) {
    %c0_i32 = arith.constant 0 : i32
    return %arg0, %arg2 : i32, i32
  }
  func.func @transform_1(%arg0: i32, %arg1: i32, %arg2: i32) -> (i32, i32) {
    %c0_i32 = arith.constant 0 : i32
    return %arg2, %arg1 : i32, i32
  }
  func.func @transform_2(%arg0: i32, %arg1: i32, %arg2: i32) -> (i32, i32) {
    %c0_i32 = arith.constant 0 : i32
    %c0_i32_0 = arith.constant 0 : i32
    return %c0_i32, %arg1 : i32, i32
  }
  func.func @transform_3(%arg0: i32, %arg1: i32, %arg2: i32) -> (i32, i32) {
    %c0_i32 = arith.constant 0 : i32
    return %arg0, %arg1 : i32, i32
  }
}

</mosaic_0001>

<llo_original>
// kernel: _lambda_.2
$region0: #{_lambda_.2}
  #allocation0 [shape = 'u32[]', space=smem, size = 0x4, offset = 0x4, fixed_abs, tag = 'smem constant byte address 0x4 - core index']
  #allocation1 [shape = 'u32[144,128]{1,0:T(1,128)}', space=vmem, size = 0x12000, scoped, tag = 'internal scratch']
  #allocation2 [shape = 'f32[144,128]{1,0:T(8,128)}', space=vmem, size = 0x12000, scoped, tag = 'scratch operand']
  %s0 = inlined_call_operand.vmem [shape: f32[144,128], index: 0, kind: input, shape index: {}]
  %s1 = inlined_call_operand.vmem [shape: f32[128,128], index: 1, kind: input, shape index: {}]
  %s2 = inlined_call_operand.hbm [shape: f32[1,128], index: 2, kind: input, shape index: {}]
  %s3 = inlined_call_operand.vmem [shape: f32[144,128], index: 3, kind: output, shape index: {}]
  %s4 = sld [smem:[#allocation0]]
  $region34: #{_lambda_.2} parent=0
    _
  %s6 = ssub.s32 1, %s4
  %s7 = scalar_select 0, %s6, %s4
  $region1: #{_lambda_.2} parent=0
    #allocation3 [shape = 'u8[512]{0}', space=vmem, size = 0x400, scoped, tag = 'input window, operand 2, single buffered']
    #allocation4 [shape = 's32[1]{0}', space=sflag, size = 0x4, scoped, tag = 'scoped memory for _lambda_.2']
    %8 = vsyncpa [#allocation4], 0
    // Predicated region
    $region2: #{_lambda_.2} parent=1 // pred_check
      _
    $region3: #{_lambda_.2} parent=1 // pred_check_branch
      %10 = sbr.rel (0) target = $region5
    $region4: #{_lambda_.2} parent=1 // pred_region
      _
    $region5: #{_lambda_.2} parent=1 // pred_fallthru
      _
    // Predicated region
    $region6: #{_lambda_.2} parent=1 // pred_check
      _
    $region7: #{_lambda_.2} parent=1 // pred_check_branch
      %12 = sbr.rel (0) target = $region9
    $region8: #{_lambda_.2} parent=1 // pred_region
      _
    $region9: #{_lambda_.2} parent=1 // pred_fallthru
      _
    // Predicated region
    $region10: #{_lambda_.2} parent=1 // pred_check
      _
    $region11: #{_lambda_.2} parent=1 // pred_check_branch
      %14 = sbr.rel (0) target = $region13
    $region12: #{_lambda_.2} parent=1 // pred_region
      %s16 = ssub.s32 16, 16
      %17 = vsyncadd [#allocation4], %s16
      %s19 = sshll.u32 [#allocation3], 4
      %s20 = int_to_ptr.vmem [resolvable:$true] %s19
      %22 = dma.hbm_to_vmem [thread:$0]  %s2, 16, %s20, [#allocation4]
    $region13: #{_lambda_.2} parent=1 // pred_fallthru
      _
    // Predicated region
    $region14: #{_lambda_.2} parent=1 // pred_check
      _
    $region15: #{_lambda_.2} parent=1 // pred_check_branch
      %24 = sbr.rel (0) target = $region17
    $region16: #{_lambda_.2} parent=1 // pred_region
      %25 = dma.done [#allocation4], 16
    $region17: #{_lambda_.2} parent=1 // pred_fallthru
      _
    %p26 = scmp.eq.s32.totalorder 0, 0
    // Predicated region
    $region18: #{_lambda_.2} parent=1 // pred_check
      %p27 = pneg %p26
    $region19: #{_lambda_.2} parent=1 // pred_check_branch
      %29 = sbr.rel (%p27) target = $region21
    $region20: #{_lambda_.2} parent=1 // pred_region
      %30 = vst [vmem:[#allocation2] sm:$0xff] 0.0
      %31 = vst [vmem:[#allocation2 + $0x8] sm:$0xff] 0.0
      %32 = vst [vmem:[#allocation2 + $0x10] sm:$0xff] 0.0
      %33 = vst [vmem:[#allocation2 + $0x18] sm:$0xff] 0.0
      %34 = vst [vmem:[#allocation2 + $0x20] sm:$0xff] 0.0
      %35 = vst [vmem:[#allocation2 + $0x28] sm:$0xff] 0.0
      %36 = vst [vmem:[#allocation2 + $0x30] sm:$0xff] 0.0
      %37 = vst [vmem:[#allocation2 + $0x38] sm:$0xff] 0.0
      %38 = vst [vmem:[#allocation2 + $0x40] sm:$0xff] 0.0
      %39 = vst [vmem:[#allocation2 + $0x48] sm:$0xff] 0.0
      %40 = vst [vmem:[#allocation2 + $0x50] sm:$0xff] 0.0
      %41 = vst [vmem:[#allocation2 + $0x58] sm:$0xff] 0.0
      %42 = vst [vmem:[#allocation2 + $0x60] sm:$0xff] 0.0
      %43 = vst [vmem:[#allocation2 + $0x68] sm:$0xff] 0.0
      %44 = vst [vmem:[#allocation2 + $0x70] sm:$0xff] 0.0
      %45 = vst [vmem:[#allocation2 + $0x78] sm:$0xff] 0.0
      %46 = vst [vmem:[#allocation2 + $0x80] sm:$0xff] 0.0
      %47 = vst [vmem:[#allocation2 + $0x88] sm:$0xff] 0.0
    $region21: #{_lambda_.2} parent=1 // pred_fallthru
      _
    %v48 = vld [vmem:[%s0] sm:$0xff]
    %v49 = vld [vmem:[%s0 + $0x8] sm:$0xff]
    %v50 = vld [vmem:[%s0 + $0x10] sm:$0xff]
    %v51 = vld [vmem:[%s0 + $0x18] sm:$0xff]
    %v52 = vld [vmem:[%s0 + $0x20] sm:$0xff]
    %v53 = vld [vmem:[%s0 + $0x28] sm:$0xff]
    %v54 = vld [vmem:[%s0 + $0x30] sm:$0xff]
    %v55 = vld [vmem:[%s0 + $0x38] sm:$0xff]
    %v56 = vld [vmem:[%s0 + $0x40] sm:$0xff]
    %v57 = vld [vmem:[%s0 + $0x48] sm:$0xff]
    %v58 = vld [vmem:[%s0 + $0x50] sm:$0xff]
    %v59 = vld [vmem:[%s0 + $0x58] sm:$0xff]
    %v60 = vld [vmem:[%s0 + $0x60] sm:$0xff]
    %v61 = vld [vmem:[%s0 + $0x68] sm:$0xff]
    %v62 = vld [vmem:[%s0 + $0x70] sm:$0xff]
    %v63 = vld [vmem:[%s0 + $0x78] sm:$0xff]
    %v64 = vld [vmem:[%s0 + $0x80] sm:$0xff]
    %v65 = vld [vmem:[%s0 + $0x88] sm:$0xff]
    %v66 = vld [vmem:[#allocation2] sm:$0xff]
    %v67 = vld [vmem:[#allocation2 + $0x8] sm:$0xff]
    %v68 = vld [vmem:[#allocation2 + $0x10] sm:$0xff]
    %v69 = vld [vmem:[#allocation2 + $0x18] sm:$0xff]
    %v70 = vld [vmem:[#allocation2 + $0x20] sm:$0xff]
    %v71 = vld [vmem:[#allocation2 + $0x28] sm:$0xff]
    %v72 = vld [vmem:[#allocation2 + $0x30] sm:$0xff]
    %v73 = vld [vmem:[#allocation2 + $0x38] sm:$0xff]
    %v74 = vld [vmem:[#allocation2 + $0x40] sm:$0xff]
    %v75 = vld [vmem:[#allocation2 + $0x48] sm:$0xff]
    %v76 = vld [vmem:[#allocation2 + $0x50] sm:$0xff]
    %v77 = vld [vmem:[#allocation2 + $0x58] sm:$0xff]
    %v78 = vld [vmem:[#allocation2 + $0x60] sm:$0xff]
    %v79 = vld [vmem:[#allocation2 + $0x68] sm:$0xff]
    %v80 = vld [vmem:[#allocation2 + $0x70] sm:$0xff]
    %v81 = vld [vmem:[#allocation2 + $0x78] sm:$0xff]
    %v82 = vld [vmem:[#allocation2 + $0x80] sm:$0xff]
    %v83 = vld [vmem:[#allocation2 + $0x88] sm:$0xff]
    %v84 = vld [vmem:[%s1] sm:$0xff]
    %v85 = vld [vmem:[%s1 + $0x8] sm:$0xff]
    %v86 = vld [vmem:[%s1 + $0x10] sm:$0xff]
    %v87 = vld [vmem:[%s1 + $0x18] sm:$0xff]
    %v88 = vld [vmem:[%s1 + $0x20] sm:$0xff]
    %v89 = vld [vmem:[%s1 + $0x28] sm:$0xff]
    %v90 = vld [vmem:[%s1 + $0x30] sm:$0xff]
    %v91 = vld [vmem:[%s1 + $0x38] sm:$0xff]
    %v92 = vld [vmem:[%s1 + $0x40] sm:$0xff]
    %v93 = vld [vmem:[%s1 + $0x48] sm:$0xff]
    %v94 = vld [vmem:[%s1 + $0x50] sm:$0xff]
    %v95 = vld [vmem:[%s1 + $0x58] sm:$0xff]
    %v96 = vld [vmem:[%s1 + $0x60] sm:$0xff]
    %v97 = vld [vmem:[%s1 + $0x68] sm:$0xff]
    %v98 = vld [vmem:[%s1 + $0x70] sm:$0xff]
    %v99 = vld [vmem:[%s1 + $0x78] sm:$0xff]
    %100 = vmatprep.subr.mxu0 0.0
    %101 = vmatpush1.msra.mxu0 %v99
    %102 = vmatprep.subr.mxu0 0.0
    %103 = vmatpush1.msra.mxu0 %v98
    %104 = vmatprep.subr.mxu0 0.0
    %105 = vmatpush1.msra.mxu0 %v97
    %106 = vmatprep.subr.mxu0 0.0
    %107 = vmatpush1.msra.mxu0 %v96
    %108 = vmatprep.subr.mxu0 0.0
    %109 = vmatpush1.msra.mxu0 %v95
    %110 = vmatprep.subr.mxu0 0.0
    %111 = vmatpush1.msra.mxu0 %v94
    %112 = vmatprep.subr.mxu0 0.0
    %113 = vmatpush1.msra.mxu0 %v93
    %114 = vmatprep.subr.mxu0 0.0
    %115 = vmatpush1.msra.mxu0 %v92
    %116 = vmatprep.subr.mxu0 0.0
    %117 = vmatpush1.msra.mxu0 %v91
    %118 = vmatprep.subr.mxu0 0.0
    %119 = vmatpush1.msra.mxu0 %v90
    %120 = vmatprep.subr.mxu0 0.0
    %121 = vmatpush1.msra.mxu0 %v89
    %122 = vmatprep.subr.mxu0 0.0
    %123 = vmatpush1.msra.mxu0 %v88
    %124 = vmatprep.subr.mxu0 0.0
    %125 = vmatpush1.msra.mxu0 %v87
    %126 = vmatprep.subr.mxu0 0.0
    %127 = vmatpush1.msra.mxu0 %v86
    %128 = vmatprep.subr.mxu0 0.0
    %129 = vmatpush1.msra.mxu0 %v85
    %130 = vmatprep.subr.mxu0 0.0
    %131 = vmatpush1.msra.mxu0 %v84
    %132 = vmatprep.subr.mxu0 0.0
    %133 = vmatpush2.msra.mxu0 0.0
    %134 = vmatprep.subr.mxu0 0.0
    %135 = vmatpush2.msra.mxu0 0.0
    %136 = vmatprep.subr.mxu0 0.0
    %137 = vmatpush2.msra.mxu0 0.0
    %138 = vmatprep.subr.mxu0 0.0
    %139 = vmatpush2.msra.mxu0 0.0
    %140 = vmatprep.subr.mxu0 0.0
    %141 = vmatpush2.msra.mxu0 0.0
    %142 = vmatprep.subr.mxu0 0.0
    %143 = vmatpush2.msra.mxu0 0.0
    %144 = vmatprep.subr.mxu0 0.0
    %145 = vmatpush2.msra.mxu0 0.0
    %146 = vmatprep.subr.mxu0 0.0
    %147 = vmatpush2.msra.mxu0 0.0
    %148 = vmatprep.subr.mxu0 0.0
    %149 = vmatpush2.msra.mxu0 0.0
    %150 = vmatprep.subr.mxu0 0.0
    %151 = vmatpush2.msra.mxu0 0.0
    %152 = vmatprep.subr.mxu0 0.0
    %153 = vmatpush2.msra.mxu0 0.0
    %154 = vmatprep.subr.mxu0 0.0
    %155 = vmatpush2.msra.mxu0 0.0
    %156 = vmatprep.subr.mxu0 0.0
    %157 = vmatpush2.msra.mxu0 0.0
    %158 = vmatprep.subr.mxu0 0.0
    %159 = vmatpush2.msra.mxu0 0.0
    %160 = vmatprep.subr.mxu0 0.0
    %161 = vmatpush2.msra.mxu0 0.0
    %162 = vmatprep.subr.mxu0 0.0
    %163 = vmatpush2.msra.mxu0 0.0
    %164 = vmatprep.mubr.f32.mxu0 0.0
    %165 = vmatmul.mubr.f32.gmra.mxu0 %v48
    %v166 = vpop.f32.mrf.mxu0
    %v167 = vadd.f32 0.0, %v166
    %v168 = vpop.f32.mrf.mxu0
    %169 = vmatprep.mubr.f32.mxu0 0.0
    %170 = vmatmul.mubr.f32.gmra.mxu0 %v49
    %v171 = vpop.f32.mrf.mxu0
    %v172 = vadd.f32 0.0, %v171
    %v173 = vpop.f32.mrf.mxu0
    %174 = vmatprep.mubr.f32.mxu0 0.0
    %175 = vmatmul.mubr.f32.gmra.mxu0 %v50
    %v176 = vpop.f32.mrf.mxu0
    %v177 = vadd.f32 0.0, %v176
    %v178 = vpop.f32.mrf.mxu0
    %179 = vmatprep.mubr.f32.mxu0 0.0
    %180 = vmatmul.mubr.f32.gmra.mxu0 %v51
    %v181 = vpop.f32.mrf.mxu0
    %v182 = vadd.f32 0.0, %v181
    %v183 = vpop.f32.mrf.mxu0
    %184 = vmatprep.mubr.f32.mxu0 0.0
    %185 = vmatmul.mubr.f32.gmra.mxu0 %v52
    %v186 = vpop.f32.mrf.mxu0
    %v187 = vadd.f32 0.0, %v186
    %v188 = vpop.f32.mrf.mxu0
    %189 = vmatprep.mubr.f32.mxu0 0.0
    %190 = vmatmul.mubr.f32.gmra.mxu0 %v53
    %v191 = vpop.f32.mrf.mxu0
    %v192 = vadd.f32 0.0, %v191
    %v193 = vpop.f32.mrf.mxu0
    %194 = vmatprep.mubr.f32.mxu0 0.0
    %195 = vmatmul.mubr.f32.gmra.mxu0 %v54
    %v196 = vpop.f32.mrf.mxu0
    %v197 = vadd.f32 0.0, %v196
    %v198 = vpop.f32.mrf.mxu0
    %199 = vmatprep.mubr.f32.mxu0 0.0
    %200 = vmatmul.mubr.f32.gmra.mxu0 %v55
    %v201 = vpop.f32.mrf.mxu0
    %v202 = vadd.f32 0.0, %v201
    %v203 = vpop.f32.mrf.mxu0
    %204 = vmatprep.mubr.f32.mxu0 0.0
    %205 = vmatmul.mubr.f32.gmra.mxu0 %v56
    %v206 = vpop.f32.mrf.mxu0
    %v207 = vadd.f32 0.0, %v206
    %v208 = vpop.f32.mrf.mxu0
    %209 = vmatprep.mubr.f32.mxu0 0.0
    %210 = vmatmul.mubr.f32.gmra.mxu0 %v57
    %v211 = vpop.f32.mrf.mxu0
    %v212 = vadd.f32 0.0, %v211
    %v213 = vpop.f32.mrf.mxu0
    %214 = vmatprep.mubr.f32.mxu0 0.0
    %215 = vmatmul.mubr.f32.gmra.mxu0 %v58
    %v216 = vpop.f32.mrf.mxu0
    %v217 = vadd.f32 0.0, %v216
    %v218 = vpop.f32.mrf.mxu0
    %219 = vmatprep.mubr.f32.mxu0 0.0
    %220 = vmatmul.mubr.f32.gmra.mxu0 %v59
    %v221 = vpop.f32.mrf.mxu0
    %v222 = vadd.f32 0.0, %v221
    %v223 = vpop.f32.mrf.mxu0
    %224 = vmatprep.mubr.f32.mxu0 0.0
    %225 = vmatmul.mubr.f32.gmra.mxu0 %v60
    %v226 = vpop.f32.mrf.mxu0
    %v227 = vadd.f32 0.0, %v226
    %v228 = vpop.f32.mrf.mxu0
    %229 = vmatprep.mubr.f32.mxu0 0.0
    %230 = vmatmul.mubr.f32.gmra.mxu0 %v61
    %v231 = vpop.f32.mrf.mxu0
    %v232 = vadd.f32 0.0, %v231
    %v233 = vpop.f32.mrf.mxu0
    %234 = vmatprep.mubr.f32.mxu0 0.0
    %235 = vmatmul.mubr.f32.gmra.mxu0 %v62
    %v236 = vpop.f32.mrf.mxu0
    %v237 = vadd.f32 0.0, %v236
    %v238 = vpop.f32.mrf.mxu0
    %239 = vmatprep.mubr.f32.mxu0 0.0
    %240 = vmatmul.mubr.f32.gmra.mxu0 %v63
    %v241 = vpop.f32.mrf.mxu0
    %v242 = vadd.f32 0.0, %v241
    %v243 = vpop.f32.mrf.mxu0
    %244 = vmatprep.mubr.f32.mxu0 0.0
    %245 = vmatmul.mubr.f32.gmra.mxu0 %v64
    %v246 = vpop.f32.mrf.mxu0
    %v247 = vadd.f32 0.0, %v246
    %v248 = vpop.f32.mrf.mxu0
    %249 = vmatprep.mubr.f32.mxu0 0.0
    %250 = vmatmul.mubr.f32.gmra.mxu0 %v65
    %v251 = vpop.f32.mrf.mxu0
    %v252 = vadd.f32 0.0, %v251
    %v253 = vpop.f32.mrf.mxu0
    %254 = vdwg.mxu0
    %v255 = vadd.f32 %v66, %v167
    %v256 = vadd.f32 %v67, %v172
    %v257 = vadd.f32 %v68, %v177
    %v258 = vadd.f32 %v69, %v182
    %v259 = vadd.f32 %v70, %v187
    %v260 = vadd.f32 %v71, %v192
    %v261 = vadd.f32 %v72, %v197
    %v262 = vadd.f32 %v73, %v202
    %v263 = vadd.f32 %v74, %v207
    %v264 = vadd.f32 %v75, %v212
    %v265 = vadd.f32 %v76, %v217
    %v266 = vadd.f32 %v77, %v222
    %v267 = vadd.f32 %v78, %v227
    %v268 = vadd.f32 %v79, %v232
    %v269 = vadd.f32 %v80, %v237
    %v270 = vadd.f32 %v81, %v242
    %v271 = vadd.f32 %v82, %v247
    %v272 = vadd.f32 %v83, %v252
    %273 = vst [vmem:[#allocation2] sm:$0xff] %v255
    %274 = vst [vmem:[#allocation2 + $0x8] sm:$0xff] %v256
    %275 = vst [vmem:[#allocation2 + $0x10] sm:$0xff] %v257
    %276 = vst [vmem:[#allocation2 + $0x18] sm:$0xff] %v258
    %277 = vst [vmem:[#allocation2 + $0x20] sm:$0xff] %v259
    %278 = vst [vmem:[#allocation2 + $0x28] sm:$0xff] %v260
    %279 = vst [vmem:[#allocation2 + $0x30] sm:$0xff] %v261
    %280 = vst [vmem:[#allocation2 + $0x38] sm:$0xff] %v262
    %281 = vst [vmem:[#allocation2 + $0x40] sm:$0xff] %v263
    %282 = vst [vmem:[#allocation2 + $0x48] sm:$0xff] %v264
    %283 = vst [vmem:[#allocation2 + $0x50] sm:$0xff] %v265
    %284 = vst [vmem:[#allocation2 + $0x58] sm:$0xff] %v266
    %285 = vst [vmem:[#allocation2 + $0x60] sm:$0xff] %v267
    %286 = vst [vmem:[#allocation2 + $0x68] sm:$0xff] %v268
    %287 = vst [vmem:[#allocation2 + $0x70] sm:$0xff] %v269
    %288 = vst [vmem:[#allocation2 + $0x78] sm:$0xff] %v270
    %289 = vst [vmem:[#allocation2 + $0x80] sm:$0xff] %v271
    %290 = vst [vmem:[#allocation2 + $0x88] sm:$0xff] %v272
    // Predicated region
    $region22: #{_lambda_.2} parent=1 // pred_check
      %p291 = pneg %p26
    $region23: #{_lambda_.2} parent=1 // pred_check_branch
      %293 = sbr.rel (%p291) target = $region25
    $region24: #{_lambda_.2} parent=1 // pred_region
      %v294 = vld [vmem:[#allocation2] sm:$0xff]
      %v295 = vld [vmem:[#allocation2 + $0x8] sm:$0xff]
      %v296 = vld [vmem:[#allocation2 + $0x10] sm:$0xff]
      %v297 = vld [vmem:[#allocation2 + $0x18] sm:$0xff]
      %v298 = vld [vmem:[#allocation2 + $0x20] sm:$0xff]
      %v299 = vld [vmem:[#allocation2 + $0x28] sm:$0xff]
      %v300 = vld [vmem:[#allocation2 + $0x30] sm:$0xff]
      %v301 = vld [vmem:[#allocation2 + $0x38] sm:$0xff]
      %v302 = vld [vmem:[#allocation2 + $0x40] sm:$0xff]
      %v303 = vld [vmem:[#allocation2 + $0x48] sm:$0xff]
      %v304 = vld [vmem:[#allocation2 + $0x50] sm:$0xff]
      %v305 = vld [vmem:[#allocation2 + $0x58] sm:$0xff]
      %v306 = vld [vmem:[#allocation2 + $0x60] sm:$0xff]
      %v307 = vld [vmem:[#allocation2 + $0x68] sm:$0xff]
      %v308 = vld [vmem:[#allocation2 + $0x70] sm:$0xff]
      %v309 = vld [vmem:[#allocation2 + $0x78] sm:$0xff]
      %v310 = vld [vmem:[#allocation2 + $0x80] sm:$0xff]
      %v311 = vld [vmem:[#allocation2 + $0x88] sm:$0xff]
      %v312 = vld [vmem:[#allocation3] sm:$0x1]
      %v314 = vlaneseq
      %v315 = vshrl.u32 %v314, 7
      %v316 = vsub.s32 0, %v315
      %v317 = vrot.slane %v312, %v316
      %v319 = vadd.f32 %v294, %v317
      %v320 = vadd.f32 %v295, %v317
      %v321 = vadd.f32 %v296, %v317
      %v322 = vadd.f32 %v297, %v317
      %v323 = vadd.f32 %v298, %v317
      %v324 = vadd.f32 %v299, %v317
      %v325 = vadd.f32 %v300, %v317
      %v326 = vadd.f32 %v301, %v317
      %v327 = vadd.f32 %v302, %v317
      %v328 = vadd.f32 %v303, %v317
      %v329 = vadd.f32 %v304, %v317
      %v330 = vadd.f32 %v305, %v317
      %v331 = vadd.f32 %v306, %v317
      %v332 = vadd.f32 %v307, %v317
      %v333 = vadd.f32 %v308, %v317
      %v334 = vadd.f32 %v309, %v317
      %v335 = vadd.f32 %v310, %v317
      %v336 = vadd.f32 %v311, %v317
      %337 = vst [vmem:[%s3] sm:$0xff] %v319
      %338 = vst [vmem:[%s3 + $0x8] sm:$0xff] %v320
      %339 = vst [vmem:[%s3 + $0x10] sm:$0xff] %v321
      %340 = vst [vmem:[%s3 + $0x18] sm:$0xff] %v322
      %341 = vst [vmem:[%s3 + $0x20] sm:$0xff] %v323
      %342 = vst [vmem:[%s3 + $0x28] sm:$0xff] %v324
      %343 = vst [vmem:[%s3 + $0x30] sm:$0xff] %v325
      %344 = vst [vmem:[%s3 + $0x38] sm:$0xff] %v326
      %345 = vst [vmem:[%s3 + $0x40] sm:$0xff] %v327
      %346 = vst [vmem:[%s3 + $0x48] sm:$0xff] %v328
      %347 = vst [vmem:[%s3 + $0x50] sm:$0xff] %v329
      %348 = vst [vmem:[%s3 + $0x58] sm:$0xff] %v330
      %349 = vst [vmem:[%s3 + $0x60] sm:$0xff] %v331
      %350 = vst [vmem:[%s3 + $0x68] sm:$0xff] %v332
      %351 = vst [vmem:[%s3 + $0x70] sm:$0xff] %v333
      %352 = vst [vmem:[%s3 + $0x78] sm:$0xff] %v334
      %353 = vst [vmem:[%s3 + $0x80] sm:$0xff] %v335
      %354 = vst [vmem:[%s3 + $0x88] sm:$0xff] %v336
    $region25: #{_lambda_.2} parent=1 // pred_fallthru
      _
    // Predicated region
    $region26: #{_lambda_.2} parent=1 // pred_check
      _
    $region27: #{_lambda_.2} parent=1 // pred_check_branch
      %356 = sbr.rel (0) target = $region29
    $region28: #{_lambda_.2} parent=1 // pred_region
      _
    $region29: #{_lambda_.2} parent=1 // pred_fallthru
      _
    // Predicated region
    $region30: #{_lambda_.2} parent=1 // pred_check
      _
    $region31: #{_lambda_.2} parent=1 // pred_check_branch
      %358 = sbr.rel (0) target = $region33
    $region32: #{_lambda_.2} parent=1 // pred_region
      _
    $region33: #{_lambda_.2} parent=1 // pred_fallthru
      _
    %359 = vsyncpa [#allocation4], 1

// kernel: _lambda_.3
$region0: #{_lambda_.3}
  #allocation0 [shape = 'u32[]', space=smem, size = 0x4, offset = 0x4, fixed_abs, tag = 'smem constant byte address 0x4 - core index']
  #allocation1 [shape = 'u32[144,128]{1,0:T(1,128)}', space=vmem, size = 0x12000, scoped, tag = 'internal scratch']
  #allocation2 [shape = 'f32[144,128]{1,0:T(8,128)}', space=vmem, size = 0x12000, scoped, tag = 'scratch operand']
  %s0 = inlined_call_operand.vmem [shape: f32[144,128], index: 0, kind: input, shape index: {}]
  %s1 = inlined_call_operand.vmem [shape: f32[128,128], index: 1, kind: input, shape index: {}]
  %s2 = inlined_call_operand.vmem [shape: f32[1,128], index: 2, kind: input, shape index: {}]
  %s3 = inlined_call_operand.vmem [shape: f32[144,128], index: 3, kind: output, shape index: {}]
  %s4 = sld [smem:[#allocation0]]
  $region30: #{_lambda_.3} parent=0
    _
  %s6 = ssub.s32 1, %s4
  %s7 = scalar_select 0, %s6, %s4
  // Predicated region
  $region2: #{_lambda_.3} parent=0 // pred_check
    _
  $region3: #{_lambda_.3} parent=0 // pred_check_branch
    %9 = sbr.rel (0) target = $region5
  $region4: #{_lambda_.3} parent=0 // pred_region
    _
  $region5: #{_lambda_.3} parent=0 // pred_fallthru
    _
  // Predicated region
  $region6: #{_lambda_.3} parent=0 // pred_check
    _
  $region7: #{_lambda_.3} parent=0 // pred_check_branch
    %11 = sbr.rel (0) target = $region9
  $region8: #{_lambda_.3} parent=0 // pred_region
    _
  $region9: #{_lambda_.3} parent=0 // pred_fallthru
    _
  // Predicated region
  $region10: #{_lambda_.3} parent=0 // pred_check
    _
  $region11: #{_lambda_.3} parent=0 // pred_check_branch
    %13 = sbr.rel (0) target = $region13
  $region12: #{_lambda_.3} parent=0 // pred_region
    _
  $region13: #{_lambda_.3} parent=0 // pred_fallthru
    _
  %p14 = scmp.eq.s32.totalorder 0, 0
  // Predicated region
  $region14: #{_lambda_.3} parent=0 // pred_check
    %p15 = pneg %p14
  $region15: #{_lambda_.3} parent=0 // pred_check_branch
    %17 = sbr.rel (%p15) target = $region17
  $region16: #{_lambda_.3} parent=0 // pred_region
    %18 = vst [vmem:[#allocation2] sm:$0xff] 0.0
    %19 = vst [vmem:[#allocation2 + $0x8] sm:$0xff] 0.0
    %20 = vst [vmem:[#allocation2 + $0x10] sm:$0xff] 0.0
    %21 = vst [vmem:[#allocation2 + $0x18] sm:$0xff] 0.0
    %22 = vst [vmem:[#allocation2 + $0x20] sm:$0xff] 0.0
    %23 = vst [vmem:[#allocation2 + $0x28] sm:$0xff] 0.0
    %24 = vst [vmem:[#allocation2 + $0x30] sm:$0xff] 0.0
    %25 = vst [vmem:[#allocation2 + $0x38] sm:$0xff] 0.0
    %26 = vst [vmem:[#allocation2 + $0x40] sm:$0xff] 0.0
    %27 = vst [vmem:[#allocation2 + $0x48] sm:$0xff] 0.0
    %28 = vst [vmem:[#allocation2 + $0x50] sm:$0xff] 0.0
    %29 = vst [vmem:[#allocation2 + $0x58] sm:$0xff] 0.0
    %30 = vst [vmem:[#allocation2 + $0x60] sm:$0xff] 0.0
    %31 = vst [vmem:[#allocation2 + $0x68] sm:$0xff] 0.0
    %32 = vst [vmem:[#allocation2 + $0x70] sm:$0xff] 0.0
    %33 = vst [vmem:[#allocation2 + $0x78] sm:$0xff] 0.0
    %34 = vst [vmem:[#allocation2 + $0x80] sm:$0xff] 0.0
    %35 = vst [vmem:[#allocation2 + $0x88] sm:$0xff] 0.0
  $region17: #{_lambda_.3} parent=0 // pred_fallthru
    _
  %v36 = vld [vmem:[%s0] sm:$0xff]
  %v37 = vld [vmem:[%s0 + $0x8] sm:$0xff]
  %v38 = vld [vmem:[%s0 + $0x10] sm:$0xff]
  %v39 = vld [vmem:[%s0 + $0x18] sm:$0xff]
  %v40 = vld [vmem:[%s0 + $0x20] sm:$0xff]
  %v41 = vld [vmem:[%s0 + $0x28] sm:$0xff]
  %v42 = vld [vmem:[%s0 + $0x30] sm:$0xff]
  %v43 = vld [vmem:[%s0 + $0x38] sm:$0xff]
  %v44 = vld [vmem:[%s0 + $0x40] sm:$0xff]
  %v45 = vld [vmem:[%s0 + $0x48] sm:$0xff]
  %v46 = vld [vmem:[%s0 + $0x50] sm:$0xff]
  %v47 = vld [vmem:[%s0 + $0x58] sm:$0xff]
  %v48 = vld [vmem:[%s0 + $0x60] sm:$0xff]
  %v49 = vld [vmem:[%s0 + $0x68] sm:$0xff]
  %v50 = vld [vmem:[%s0 + $0x70] sm:$0xff]
  %v51 = vld [vmem:[%s0 + $0x78] sm:$0xff]
  %v52 = vld [vmem:[%s0 + $0x80] sm:$0xff]
  %v53 = vld [vmem:[%s0 + $0x88] sm:$0xff]
  %v54 = vmul.f32 %v36, 0.5
  %v55 = vmul.f32 %v37, 0.5
  %v56 = vmul.f32 %v38, 0.5
  %v57 = vmul.f32 %v39, 0.5
  %v58 = vmul.f32 %v40, 0.5
  %v59 = vmul.f32 %v41, 0.5
  %v60 = vmul.f32 %v42, 0.5
  %v61 = vmul.f32 %v43, 0.5
  %v62 = vmul.f32 %v44, 0.5
  %v63 = vmul.f32 %v45, 0.5
  %v64 = vmul.f32 %v46, 0.5
  %v65 = vmul.f32 %v47, 0.5
  %v66 = vmul.f32 %v48, 0.5
  %v67 = vmul.f32 %v49, 0.5
  %v68 = vmul.f32 %v50, 0.5
  %v69 = vmul.f32 %v51, 0.5
  %v70 = vmul.f32 %v52, 0.5
  %v71 = vmul.f32 %v53, 0.5
  %v72 = vmul.f32 %v36, 0.044715
  %v73 = vmul.f32 %v37, 0.044715
  %v74 = vmul.f32 %v38, 0.044715
  %v75 = vmul.f32 %v39, 0.044715
  %v76 = vmul.f32 %v40, 0.044715
  %v77 = vmul.f32 %v41, 0.044715
  %v78 = vmul.f32 %v42, 0.044715
  %v79 = vmul.f32 %v43, 0.044715
  %v80 = vmul.f32 %v44, 0.044715
  %v81 = vmul.f32 %v45, 0.044715
  %v82 = vmul.f32 %v46, 0.044715
  %v83 = vmul.f32 %v47, 0.044715
  %v84 = vmul.f32 %v48, 0.044715
  %v85 = vmul.f32 %v49, 0.044715
  %v86 = vmul.f32 %v50, 0.044715
  %v87 = vmul.f32 %v51, 0.044715
  %v88 = vmul.f32 %v52, 0.044715
  %v89 = vmul.f32 %v53, 0.044715
  %v90 = vmul.f32 %v72, %v36
  %v91 = vmul.f32 %v73, %v37
  %v92 = vmul.f32 %v74, %v38
  %v93 = vmul.f32 %v75, %v39
  %v94 = vmul.f32 %v76, %v40
  %v95 = vmul.f32 %v77, %v41
  %v96 = vmul.f32 %v78, %v42
  %v97 = vmul.f32 %v79, %v43
  %v98 = vmul.f32 %v80, %v44
  %v99 = vmul.f32 %v81, %v45
  %v100 = vmul.f32 %v82, %v46
  %v101 = vmul.f32 %v83, %v47
  %v102 = vmul.f32 %v84, %v48
  %v103 = vmul.f32 %v85, %v49
  %v104 = vmul.f32 %v86, %v50
  %v105 = vmul.f32 %v87, %v51
  %v106 = vmul.f32 %v88, %v52
  %v107 = vmul.f32 %v89, %v53
  %v108 = vmul.f32 %v90, %v36
  %v109 = vmul.f32 %v91, %v37
  %v110 = vmul.f32 %v92, %v38
  %v111 = vmul.f32 %v93, %v39
  %v112 = vmul.f32 %v94, %v40
  %v113 = vmul.f32 %v95, %v41
  %v114 = vmul.f32 %v96, %v42
  %v115 = vmul.f32 %v97, %v43
  %v116 = vmul.f32 %v98, %v44
  %v117 = vmul.f32 %v99, %v45
  %v118 = vmul.f32 %v100, %v46
  %v119 = vmul.f32 %v101, %v47
  %v120 = vmul.f32 %v102, %v48
  %v121 = vmul.f32 %v103, %v49
  %v122 = vmul.f32 %v104, %v50
  %v123 = vmul.f32 %v105, %v51
  %v124 = vmul.f32 %v106, %v52
  %v125 = vmul.f32 %v107, %v53
  %v126 = vadd.f32 %v36, %v108
  %v127 = vadd.f32 %v37, %v109
  %v128 = vadd.f32 %v38, %v110
  %v129 = vadd.f32 %v39, %v111
  %v130 = vadd.f32 %v40, %v112
  %v131 = vadd.f32 %v41, %v113
  %v132 = vadd.f32 %v42, %v114
  %v133 = vadd.f32 %v43, %v115
  %v134 = vadd.f32 %v44, %v116
  %v135 = vadd.f32 %v45, %v117
  %v136 = vadd.f32 %v46, %v118
  %v137 = vadd.f32 %v47, %v119
  %v138 = vadd.f32 %v48, %v120
  %v139 = vadd.f32 %v49, %v121
  %v140 = vadd.f32 %v50, %v122
  %v141 = vadd.f32 %v51, %v123
  %v142 = vadd.f32 %v52, %v124
  %v143 = vadd.f32 %v53, %v125
  %v144 = vmul.f32 %v126, 0.7978846
  %v145 = vmul.f32 %v127, 0.7978846
  %v146 = vmul.f32 %v128, 0.7978846
  %v147 = vmul.f32 %v129, 0.7978846
  %v148 = vmul.f32 %v130, 0.7978846
  %v149 = vmul.f32 %v131, 0.7978846
  %v150 = vmul.f32 %v132, 0.7978846
  %v151 = vmul.f32 %v133, 0.7978846
  %v152 = vmul.f32 %v134, 0.7978846
  %v153 = vmul.f32 %v135, 0.7978846
  %v154 = vmul.f32 %v136, 0.7978846
  %v155 = vmul.f32 %v137, 0.7978846
  %v156 = vmul.f32 %v138, 0.7978846
  %v157 = vmul.f32 %v139, 0.7978846
  %v158 = vmul.f32 %v140, 0.7978846
  %v159 = vmul.f32 %v141, 0.7978846
  %v160 = vmul.f32 %v142, 0.7978846
  %v161 = vmul.f32 %v143, 0.7978846
  %v162 = vtanh.pop %v144
  %v163 = vtanh.pop %v145
  %v164 = vtanh.pop %v146
  %v165 = vtanh.pop %v147
  %v166 = vtanh.pop %v148
  %v167 = vtanh.pop %v149
  %v168 = vtanh.pop %v150
  %v169 = vtanh.pop %v151
  %v170 = vtanh.pop %v152
  %v171 = vtanh.pop %v153
  %v172 = vtanh.pop %v154
  %v173 = vtanh.pop %v155
  %v174 = vtanh.pop %v156
  %v175 = vtanh.pop %v157
  %v176 = vtanh.pop %v158
  %v177 = vtanh.pop %v159
  %v178 = vtanh.pop %v160
  %v179 = vtanh.pop %v161
  %v180 = vadd.f32 %v162, 1.0
  %v181 = vadd.f32 %v163, 1.0
  %v182 = vadd.f32 %v164, 1.0
  %v183 = vadd.f32 %v165, 1.0
  %v184 = vadd.f32 %v166, 1.0
  %v185 = vadd.f32 %v167, 1.0
  %v186 = vadd.f32 %v168, 1.0
  %v187 = vadd.f32 %v169, 1.0
  %v188 = vadd.f32 %v170, 1.0
  %v189 = vadd.f32 %v171, 1.0
  %v190 = vadd.f32 %v172, 1.0
  %v191 = vadd.f32 %v173, 1.0
  %v192 = vadd.f32 %v174, 1.0
  %v193 = vadd.f32 %v175, 1.0
  %v194 = vadd.f32 %v176, 1.0
  %v195 = vadd.f32 %v177, 1.0
  %v196 = vadd.f32 %v178, 1.0
  %v197 = vadd.f32 %v179, 1.0
  %v198 = vmul.f32 %v54, %v180
  %v199 = vmul.f32 %v55, %v181
  %v200 = vmul.f32 %v56, %v182
  %v201 = vmul.f32 %v57, %v183
  %v202 = vmul.f32 %v58, %v184
  %v203 = vmul.f32 %v59, %v185
  %v204 = vmul.f32 %v60, %v186
  %v205 = vmul.f32 %v61, %v187
  %v206 = vmul.f32 %v62, %v188
  %v207 = vmul.f32 %v63, %v189
  %v208 = vmul.f32 %v64, %v190
  %v209 = vmul.f32 %v65, %v191
  %v210 = vmul.f32 %v66, %v192
  %v211 = vmul.f32 %v67, %v193
  %v212 = vmul.f32 %v68, %v194
  %v213 = vmul.f32 %v69, %v195
  %v214 = vmul.f32 %v70, %v196
  %v215 = vmul.f32 %v71, %v197
  %v216 = vld [vmem:[#allocation2] sm:$0xff]
  %v217 = vld [vmem:[#allocation2 + $0x8] sm:$0xff]
  %v218 = vld [vmem:[#allocation2 + $0x10] sm:$0xff]
  %v219 = vld [vmem:[#allocation2 + $0x18] sm:$0xff]
  %v220 = vld [vmem:[#allocation2 + $0x20] sm:$0xff]
  %v221 = vld [vmem:[#allocation2 + $0x28] sm:$0xff]
  %v222 = vld [vmem:[#allocation2 + $0x30] sm:$0xff]
  %v223 = vld [vmem:[#allocation2 + $0x38] sm:$0xff]
  %v224 = vld [vmem:[#allocation2 + $0x40] sm:$0xff]
  %v225 = vld [vmem:[#allocation2 + $0x48] sm:$0xff]
  %v226 = vld [vmem:[#allocation2 + $0x50] sm:$0xff]
  %v227 = vld [vmem:[#allocation2 + $0x58] sm:$0xff]
  %v228 = vld [vmem:[#allocation2 + $0x60] sm:$0xff]
  %v229 = vld [vmem:[#allocation2 + $0x68] sm:$0xff]
  %v230 = vld [vmem:[#allocation2 + $0x70] sm:$0xff]
  %v231 = vld [vmem:[#allocation2 + $0x78] sm:$0xff]
  %v232 = vld [vmem:[#allocation2 + $0x80] sm:$0xff]
  %v233 = vld [vmem:[#allocation2 + $0x88] sm:$0xff]
  %v234 = vld [vmem:[%s1] sm:$0xff]
  %v235 = vld [vmem:[%s1 + $0x8] sm:$0xff]
  %v236 = vld [vmem:[%s1 + $0x10] sm:$0xff]
  %v237 = vld [vmem:[%s1 + $0x18] sm:$0xff]
  %v238 = vld [vmem:[%s1 + $0x20] sm:$0xff]
  %v239 = vld [vmem:[%s1 + $0x28] sm:$0xff]
  %v240 = vld [vmem:[%s1 + $0x30] sm:$0xff]
  %v241 = vld [vmem:[%s1 + $0x38] sm:$0xff]
  %v242 = vld [vmem:[%s1 + $0x40] sm:$0xff]
  %v243 = vld [vmem:[%s1 + $0x48] sm:$0xff]
  %v244 = vld [vmem:[%s1 + $0x50] sm:$0xff]
  %v245 = vld [vmem:[%s1 + $0x58] sm:$0xff]
  %v246 = vld [vmem:[%s1 + $0x60] sm:$0xff]
  %v247 = vld [vmem:[%s1 + $0x68] sm:$0xff]
  %v248 = vld [vmem:[%s1 + $0x70] sm:$0xff]
  %v249 = vld [vmem:[%s1 + $0x78] sm:$0xff]
  %250 = vmatprep.subr.mxu0 0.0
  %251 = vmatpush1.msra.mxu0 %v249
  %252 = vmatprep.subr.mxu0 0.0
  %253 = vmatpush1.msra.mxu0 %v248
  %254 = vmatprep.subr.mxu0 0.0
  %255 = vmatpush1.msra.mxu0 %v247
  %256 = vmatprep.subr.mxu0 0.0
  %257 = vmatpush1.msra.mxu0 %v246
  %258 = vmatprep.subr.mxu0 0.0
  %259 = vmatpush1.msra.mxu0 %v245
  %260 = vmatprep.subr.mxu0 0.0
  %261 = vmatpush1.msra.mxu0 %v244
  %262 = vmatprep.subr.mxu0 0.0
  %263 = vmatpush1.msra.mxu0 %v243
  %264 = vmatprep.subr.mxu0 0.0
  %265 = vmatpush1.msra.mxu0 %v242
  %266 = vmatprep.subr.mxu0 0.0
  %267 = vmatpush1.msra.mxu0 %v241
  %268 = vmatprep.subr.mxu0 0.0
  %269 = vmatpush1.msra.mxu0 %v240
  %270 = vmatprep.subr.mxu0 0.0
  %271 = vmatpush1.msra.mxu0 %v239
  %272 = vmatprep.subr.mxu0 0.0
  %273 = vmatpush1.msra.mxu0 %v238
  %274 = vmatprep.subr.mxu0 0.0
  %275 = vmatpush1.msra.mxu0 %v237
  %276 = vmatprep.subr.mxu0 0.0
  %277 = vmatpush1.msra.mxu0 %v236
  %278 = vmatprep.subr.mxu0 0.0
  %279 = vmatpush1.msra.mxu0 %v235
  %280 = vmatprep.subr.mxu0 0.0
  %281 = vmatpush1.msra.mxu0 %v234
  %282 = vmatprep.subr.mxu0 0.0
  %283 = vmatpush2.msra.mxu0 0.0
  %284 = vmatprep.subr.mxu0 0.0
  %285 = vmatpush2.msra.mxu0 0.0
  %286 = vmatprep.subr.mxu0 0.0
  %287 = vmatpush2.msra.mxu0 0.0
  %288 = vmatprep.subr.mxu0 0.0
  %289 = vmatpush2.msra.mxu0 0.0
  %290 = vmatprep.subr.mxu0 0.0
  %291 = vmatpush2.msra.mxu0 0.0
  %292 = vmatprep.subr.mxu0 0.0
  %293 = vmatpush2.msra.mxu0 0.0
  %294 = vmatprep.subr.mxu0 0.0
  %295 = vmatpush2.msra.mxu0 0.0
  %296 = vmatprep.subr.mxu0 0.0
  %297 = vmatpush2.msra.mxu0 0.0
  %298 = vmatprep.subr.mxu0 0.0
  %299 = vmatpush2.msra.mxu0 0.0
  %300 = vmatprep.subr.mxu0 0.0
  %301 = vmatpush2.msra.mxu0 0.0
  %302 = vmatprep.subr.mxu0 0.0
  %303 = vmatpush2.msra.mxu0 0.0
  %304 = vmatprep.subr.mxu0 0.0
  %305 = vmatpush2.msra.mxu0 0.0
  %306 = vmatprep.subr.mxu0 0.0
  %307 = vmatpush2.msra.mxu0 0.0
  %308 = vmatprep.subr.mxu0 0.0
  %309 = vmatpush2.msra.mxu0 0.0
  %310 = vmatprep.subr.mxu0 0.0
  %311 = vmatpush2.msra.mxu0 0.0
  %312 = vmatprep.subr.mxu0 0.0
  %313 = vmatpush2.msra.mxu0 0.0
  %314 = vmatprep.mubr.f32.mxu0 0.0
  %315 = vmatmul.mubr.f32.gmra.mxu0 %v198
  %v316 = vpop.f32.mrf.mxu0
  %v317 = vadd.f32 0.0, %v316
  %v318 = vpop.f32.mrf.mxu0
  %319 = vmatprep.mubr.f32.mxu0 0.0
  %320 = vmatmul.mubr.f32.gmra.mxu0 %v199
  %v321 = vpop.f32.mrf.mxu0
  %v322 = vadd.f32 0.0, %v321
  %v323 = vpop.f32.mrf.mxu0
  %324 = vmatprep.mubr.f32.mxu0 0.0
  %325 = vmatmul.mubr.f32.gmra.mxu0 %v200
  %v326 = vpop.f32.mrf.mxu0
  %v327 = vadd.f32 0.0, %v326
  %v328 = vpop.f32.mrf.mxu0
  %329 = vmatprep.mubr.f32.mxu0 0.0
  %330 = vmatmul.mubr.f32.gmra.mxu0 %v201
  %v331 = vpop.f32.mrf.mxu0
  %v332 = vadd.f32 0.0, %v331
  %v333 = vpop.f32.mrf.mxu0
  %334 = vmatprep.mubr.f32.mxu0 0.0
  %335 = vmatmul.mubr.f32.gmra.mxu0 %v202
  %v336 = vpop.f32.mrf.mxu0
  %v337 = vadd.f32 0.0, %v336
  %v338 = vpop.f32.mrf.mxu0
  %339 = vmatprep.mubr.f32.mxu0 0.0
  %340 = vmatmul.mubr.f32.gmra.mxu0 %v203
  %v341 = vpop.f32.mrf.mxu0
  %v342 = vadd.f32 0.0, %v341
  %v343 = vpop.f32.mrf.mxu0
  %344 = vmatprep.mubr.f32.mxu0 0.0
  %345 = vmatmul.mubr.f32.gmra.mxu0 %v204
  %v346 = vpop.f32.mrf.mxu0
  %v347 = vadd.f32 0.0, %v346
  %v348 = vpop.f32.mrf.mxu0
  %349 = vmatprep.mubr.f32.mxu0 0.0
  %350 = vmatmul.mubr.f32.gmra.mxu0 %v205
  %v351 = vpop.f32.mrf.mxu0
  %v352 = vadd.f32 0.0, %v351
  %v353 = vpop.f32.mrf.mxu0
  %354 = vmatprep.mubr.f32.mxu0 0.0
  %355 = vmatmul.mubr.f32.gmra.mxu0 %v206
  %v356 = vpop.f32.mrf.mxu0
  %v357 = vadd.f32 0.0, %v356
  %v358 = vpop.f32.mrf.mxu0
  %359 = vmatprep.mubr.f32.mxu0 0.0
  %360 = vmatmul.mubr.f32.gmra.mxu0 %v207
  %v361 = vpop.f32.mrf.mxu0
  %v362 = vadd.f32 0.0, %v361
  %v363 = vpop.f32.mrf.mxu0
  %364 = vmatprep.mubr.f32.mxu0 0.0
  %365 = vmatmul.mubr.f32.gmra.mxu0 %v208
  %v366 = vpop.f32.mrf.mxu0
  %v367 = vadd.f32 0.0, %v366
  %v368 = vpop.f32.mrf.mxu0
  %369 = vmatprep.mubr.f32.mxu0 0.0
  %370 = vmatmul.mubr.f32.gmra.mxu0 %v209
  %v371 = vpop.f32.mrf.mxu0
  %v372 = vadd.f32 0.0, %v371
  %v373 = vpop.f32.mrf.mxu0
  %374 = vmatprep.mubr.f32.mxu0 0.0
  %375 = vmatmul.mubr.f32.gmra.mxu0 %v210
  %v376 = vpop.f32.mrf.mxu0
  %v377 = vadd.f32 0.0, %v376
  %v378 = vpop.f32.mrf.mxu0
  %379 = vmatprep.mubr.f32.mxu0 0.0
  %380 = vmatmul.mubr.f32.gmra.mxu0 %v211
  %v381 = vpop.f32.mrf.mxu0
  %v382 = vadd.f32 0.0, %v381
  %v383 = vpop.f32.mrf.mxu0
  %384 = vmatprep.mubr.f32.mxu0 0.0
  %385 = vmatmul.mubr.f32.gmra.mxu0 %v212
  %v386 = vpop.f32.mrf.mxu0
  %v387 = vadd.f32 0.0, %v386
  %v388 = vpop.f32.mrf.mxu0
  %389 = vmatprep.mubr.f32.mxu0 0.0
  %390 = vmatmul.mubr.f32.gmra.mxu0 %v213
  %v391 = vpop.f32.mrf.mxu0
  %v392 = vadd.f32 0.0, %v391
  %v393 = vpop.f32.mrf.mxu0
  %394 = vmatprep.mubr.f32.mxu0 0.0
  %395 = vmatmul.mubr.f32.gmra.mxu0 %v214
  %v396 = vpop.f32.mrf.mxu0
  %v397 = vadd.f32 0.0, %v396
  %v398 = vpop.f32.mrf.mxu0
  %399 = vmatprep.mubr.f32.mxu0 0.0
  %400 = vmatmul.mubr.f32.gmra.mxu0 %v215
  %v401 = vpop.f32.mrf.mxu0
  %v402 = vadd.f32 0.0, %v401
  %v403 = vpop.f32.mrf.mxu0
  %404 = vdwg.mxu0
  %v405 = vadd.f32 %v216, %v317
  %v406 = vadd.f32 %v217, %v322
  %v407 = vadd.f32 %v218, %v327
  %v408 = vadd.f32 %v219, %v332
  %v409 = vadd.f32 %v220, %v337
  %v410 = vadd.f32 %v221, %v342
  %v411 = vadd.f32 %v222, %v347
  %v412 = vadd.f32 %v223, %v352
  %v413 = vadd.f32 %v224, %v357
  %v414 = vadd.f32 %v225, %v362
  %v415 = vadd.f32 %v226, %v367
  %v416 = vadd.f32 %v227, %v372
  %v417 = vadd.f32 %v228, %v377
  %v418 = vadd.f32 %v229, %v382
  %v419 = vadd.f32 %v230, %v387
  %v420 = vadd.f32 %v231, %v392
  %v421 = vadd.f32 %v232, %v397
  %v422 = vadd.f32 %v233, %v402
  %423 = vst [vmem:[#allocation2] sm:$0xff] %v405
  %424 = vst [vmem:[#allocation2 + $0x8] sm:$0xff] %v406
  %425 = vst [vmem:[#allocation2 + $0x10] sm:$0xff] %v407
  %426 = vst [vmem:[#allocation2 + $0x18] sm:$0xff] %v408
  %427 = vst [vmem:[#allocation2 + $0x20] sm:$0xff] %v409
  %428 = vst [vmem:[#allocation2 + $0x28] sm:$0xff] %v410
  %429 = vst [vmem:[#allocation2 + $0x30] sm:$0xff] %v411
  %430 = vst [vmem:[#allocation2 + $0x38] sm:$0xff] %v412
  %431 = vst [vmem:[#allocation2 + $0x40] sm:$0xff] %v413
  %432 = vst [vmem:[#allocation2 + $0x48] sm:$0xff] %v414
  %433 = vst [vmem:[#allocation2 + $0x50] sm:$0xff] %v415
  %434 = vst [vmem:[#allocation2 + $0x58] sm:$0xff] %v416
  %435 = vst [vmem:[#allocation2 + $0x60] sm:$0xff] %v417
  %436 = vst [vmem:[#allocation2 + $0x68] sm:$0xff] %v418
  %437 = vst [vmem:[#allocation2 + $0x70] sm:$0xff] %v419
  %438 = vst [vmem:[#allocation2 + $0x78] sm:$0xff] %v420
  %439 = vst [vmem:[#allocation2 + $0x80] sm:$0xff] %v421
  %440 = vst [vmem:[#allocation2 + $0x88] sm:$0xff] %v422
  // Predicated region
  $region18: #{_lambda_.3} parent=0 // pred_check
    %p441 = pneg %p14
  $region19: #{_lambda_.3} parent=0 // pred_check_branch
    %443 = sbr.rel (%p441) target = $region21
  $region20: #{_lambda_.3} parent=0 // pred_region
    %v444 = vld [vmem:[#allocation2] sm:$0xff]
    %v445 = vld [vmem:[#allocation2 + $0x8] sm:$0xff]
    %v446 = vld [vmem:[#allocation2 + $0x10] sm:$0xff]
    %v447 = vld [vmem:[#allocation2 + $0x18] sm:$0xff]
    %v448 = vld [vmem:[#allocation2 + $0x20] sm:$0xff]
    %v449 = vld [vmem:[#allocation2 + $0x28] sm:$0xff]
    %v450 = vld [vmem:[#allocation2 + $0x30] sm:$0xff]
    %v451 = vld [vmem:[#allocation2 + $0x38] sm:$0xff]
    %v452 = vld [vmem:[#allocation2 + $0x40] sm:$0xff]
    %v453 = vld [vmem:[#allocation2 + $0x48] sm:$0xff]
    %v454 = vld [vmem:[#allocation2 + $0x50] sm:$0xff]
    %v455 = vld [vmem:[#allocation2 + $0x58] sm:$0xff]
    %v456 = vld [vmem:[#allocation2 + $0x60] sm:$0xff]
    %v457 = vld [vmem:[#allocation2 + $0x68] sm:$0xff]
    %v458 = vld [vmem:[#allocation2 + $0x70] sm:$0xff]
    %v459 = vld [vmem:[#allocation2 + $0x78] sm:$0xff]
    %v460 = vld [vmem:[#allocation2 + $0x80] sm:$0xff]
    %v461 = vld [vmem:[#allocation2 + $0x88] sm:$0xff]
    %v462 = vld [vmem:[%s2] sm:$0x1]
    %v464 = vlaneseq
    %v465 = vshrl.u32 %v464, 7
    %v466 = vsub.s32 0, %v465
    %v467 = vrot.slane %v462, %v466
    %v469 = vadd.f32 %v444, %v467
    %v470 = vadd.f32 %v445, %v467
    %v471 = vadd.f32 %v446, %v467
    %v472 = vadd.f32 %v447, %v467
    %v473 = vadd.f32 %v448, %v467
    %v474 = vadd.f32 %v449, %v467
    %v475 = vadd.f32 %v450, %v467
    %v476 = vadd.f32 %v451, %v467
    %v477 = vadd.f32 %v452, %v467
    %v478 = vadd.f32 %v453, %v467
    %v479 = vadd.f32 %v454, %v467
    %v480 = vadd.f32 %v455, %v467
    %v481 = vadd.f32 %v456, %v467
    %v482 = vadd.f32 %v457, %v467
    %v483 = vadd.f32 %v458, %v467
    %v484 = vadd.f32 %v459, %v467
    %v485 = vadd.f32 %v460, %v467
    %v486 = vadd.f32 %v461, %v467
    %487 = vst [vmem:[%s3] sm:$0xff] %v469
    %488 = vst [vmem:[%s3 + $0x8] sm:$0xff] %v470
    %489 = vst [vmem:[%s3 + $0x10] sm:$0xff] %v471
    %490 = vst [vmem:[%s3 + $0x18] sm:$0xff] %v472
    %491 = vst [vmem:[%s3 + $0x20] sm:$0xff] %v473
    %492 = vst [vmem:[%s3 + $0x28] sm:$0xff] %v474
    %493 = vst [vmem:[%s3 + $0x30] sm:$0xff] %v475
    %494 = vst [vmem:[%s3 + $0x38] sm:$0xff] %v476
    %495 = vst [vmem:[%s3 + $0x40] sm:$0xff] %v477
    %496 = vst [vmem:[%s3 + $0x48] sm:$0xff] %v478
    %497 = vst [vmem:[%s3 + $0x50] sm:$0xff] %v479
    %498 = vst [vmem:[%s3 + $0x58] sm:$0xff] %v480
    %499 = vst [vmem:[%s3 + $0x60] sm:$0xff] %v481
    %500 = vst [vmem:[%s3 + $0x68] sm:$0xff] %v482
    %501 = vst [vmem:[%s3 + $0x70] sm:$0xff] %v483
    %502 = vst [vmem:[%s3 + $0x78] sm:$0xff] %v484
    %503 = vst [vmem:[%s3 + $0x80] sm:$0xff] %v485
    %504 = vst [vmem:[%s3 + $0x88] sm:$0xff] %v486
  $region21: #{_lambda_.3} parent=0 // pred_fallthru
    _
  // Predicated region
  $region22: #{_lambda_.3} parent=0 // pred_check
    _
  $region23: #{_lambda_.3} parent=0 // pred_check_branch
    %506 = sbr.rel (0) target = $region25
  $region24: #{_lambda_.3} parent=0 // pred_region
    _
  $region25: #{_lambda_.3} parent=0 // pred_fallthru
    _
  // Predicated region
  $region26: #{_lambda_.3} parent=0 // pred_check
    _
  $region27: #{_lambda_.3} parent=0 // pred_check_branch
    %508 = sbr.rel (0) target = $region29
  $region28: #{_lambda_.3} parent=0 // pred_region
    _
  $region29: #{_lambda_.3} parent=0 // pred_fallthru
    _

</llo_original>
